<compile_context>
chip_gen: v6e
topology: v6e:2x2x1
jax: 0.10.0
libtpu: 0.0.40
codegen_flags: <defaults>
</compile_context>

<pallas_src>
import functools
import math

import jax
import jax.numpy as jnp
from jax import lax
from jax.experimental import pallas as pl
from jax.experimental.pallas import tpu as pltpu

LANE = 128  # lane width: conv outputs / Q outputs are padded to this for dense stores


def _round_up(x, m):
    return ((x + m - 1) // m) * m


# ----------------------------- Pallas kernels ------------------------------

def conv_mm_relu_kernel(x_ref, w_ref, b_ref, o_ref):
    """(row_tile, K) @ (K, 128) + bias, ReLU.  Output lanes padded to 128."""
    h = jnp.dot(x_ref[...], w_ref[...], preferred_element_type=jnp.float32)
    o_ref[...] = jnp.maximum(h + b_ref[...], 0.0)


def conv_mm_relu(patch, wmat, bias, row_tile=256):
    """Row-tiled conv-as-matmul.  patch: (rows, K) channel-last im2col."""
    rows, kdim = patch.shape
    fpad = wmat.shape[1]                       # 128 (lane-dense)
    rt = min(row_tile, _round_up(rows, 8))
    rows_pad = _round_up(rows, rt)
    if rows_pad != rows:
        patch = jnp.pad(patch, ((0, rows_pad - rows), (0, 0)))
    out = pl.pallas_call(
        conv_mm_relu_kernel,
        out_shape=jax.ShapeDtypeStruct((rows_pad, fpad), jnp.float32),
        grid=(rows_pad // rt,),
        in_specs=[pl.BlockSpec((rt, kdim), lambda i: (i, 0)),
                  pl.BlockSpec((kdim, fpad), lambda i: (0, 0)),
                  pl.BlockSpec((1, fpad), lambda i: (0, 0))],
        out_specs=pl.BlockSpec((rt, fpad), lambda i: (i, 0)),
        compiler_params=pltpu.CompilerParams(
            dimension_semantics=("parallel",)),
    )(patch, wmat, bias)
    return out[:rows]


def head_kernel(x_ref, a_ref, fcw_ref, fcb_ref, g_ref, beta_ref,
                w1o_ref, w1a_ref, b1_ref, w2_ref, b2_ref, w3_ref, b3_ref,
                o_ref):
    """Fused encoder head + both Q nets: fc -> LayerNorm -> 3-layer MLP x2.

    Q1/Q2 weights are merged along lanes (W2 is block-diagonal, W3 padded to
    128 output lanes) so `feat` never leaves VMEM and the store is lane-dense.
    """
    # encoder fc + LayerNorm (eps=1e-5, PyTorch default); output_logits=True -> no tanh
    h = jnp.dot(x_ref[...], fcw_ref[...], preferred_element_type=jnp.float32)
    h = h + fcb_ref[...]
    mean = jnp.mean(h, axis=-1, keepdims=True)
    var = jnp.mean((h - mean) ** 2, axis=-1, keepdims=True)
    feat = (h - mean) * lax.rsqrt(var + 1e-5) * g_ref[...] + beta_ref[...]
    # cat([obs, act], 1) @ W1 computed as obs@W1o + act@W1a (same math, no concat)
    h1 = (jnp.dot(feat, w1o_ref[...], preferred_element_type=jnp.float32)
          + jnp.dot(a_ref[...], w1a_ref[...], preferred_element_type=jnp.float32)
          + b1_ref[...])
    h1 = jnp.maximum(h1, 0.0)
    h2 = jnp.dot(h1, w2_ref[...], preferred_element_type=jnp.float32) + b2_ref[...]
    h2 = jnp.maximum(h2, 0.0)
    q = jnp.dot(h2, w3_ref[...], preferred_element_type=jnp.float32) + b3_ref[...]
    o_ref[...] = q.astype(o_ref.dtype)


def head_call(xflat, action, kp, batch_tile=256):
    b, flat = xflat.shape
    adim = action.shape[1]
    feat_dim = kp["fc_w"].shape[1]
    h2dim = kp["w2"].shape[1]                  # 2 * hidden_dim
    bt = min(batch_tile, _round_up(b, 8))
    b_pad = _round_up(b, bt)
    if b_pad != b:
        xflat = jnp.pad(xflat, ((0, b_pad - b), (0, 0)))
        action = jnp.pad(action, ((0, b_pad - b), (0, 0)))
    full = lambda shape: pl.BlockSpec(shape, lambda i: (0, 0))
    out = pl.pallas_call(
        head_kernel,
        out_shape=jax.ShapeDtypeStruct((b_pad, LANE), jnp.float32),
        grid=(b_pad // bt,),
        in_specs=[pl.BlockSpec((bt, flat), lambda i: (i, 0)),
                  pl.BlockSpec((bt, adim), lambda i: (i, 0)),
                  full((flat, feat_dim)),
                  full((1, feat_dim)),
                  full((1, feat_dim)),
                  full((1, feat_dim)),
                  full((feat_dim, h2dim)),
                  full((adim, h2dim)),
                  full((1, h2dim)),
                  full((h2dim, h2dim)),
                  full((1, h2dim)),
                  full((h2dim, LANE)),
                  full((1, LANE))],
        out_specs=pl.BlockSpec((bt, LANE), lambda i: (i, 0)),
        compiler_params=pltpu.CompilerParams(
            dimension_semantics=("parallel",)),
    )(xflat, action, kp["fc_w"], kp["fc_b"], kp["ln_g"], kp["ln_b"],
      kp["w1o"], kp["w1a"], kp["b1"], kp["w2"], kp["b2"], kp["w3"], kp["b3"])
    return out[:b, 0:1], out[:b, 1:2]          # q1, q2


# ------------------------------ JAX glue ------------------------------------

def im2col_nhwc(x, k, s):
    """Channel-last valid-padding im2col: (B,H,W,C) -> (B*Ho*Wo, k*k*C).

    Column order is (kh, kw, C); no transposes are materialized."""
    b, h, w, c = x.shape
    ho = (h - k) // s + 1
    wo = (w - k) // s + 1
    cols = []
    for di in range(k):
        for dj in range(k):
            cols.append(x[:, di:di + s * (ho - 1) + 1:s,
                            dj:dj + s * (wo - 1) + 1:s, :])
    patch = jnp.concatenate(cols, axis=-1)      # (B, Ho, Wo, k*k*C)
    return patch.reshape(b * ho * wo, k * k * c), (b, ho, wo)


def critic_forward(kparams, obs, action, *, num_filters, detach_encoder=False):
    # TODO(synk): detach_encoder only stops gradients in PyTorch; it is a no-op
    # for a forward-only kernel.
    x = obs.astype(jnp.float32).transpose(0, 2, 3, 1)   # NCHW -> NHWC once, on raw obs
    # /255 is folded into conv1 weights (see prepare_kernel_params)
    for i, (wmat, bvec) in enumerate(zip(kparams["conv_w"], kparams["conv_b"])):
        stride = 2 if i == 0 else 1
        patch, (bsz, ho, wo) = im2col_nhwc(x, 3, stride)
        out = conv_mm_relu(patch, wmat, bvec)            # (rows, 128) lane-dense
        x = out[:, :num_filters].reshape(bsz, ho, wo, num_filters)
    xflat = x.reshape(x.shape[0], -1)                    # NHWC flatten
    return head_call(xflat, action, kparams)


# -------------------------- deterministic init ------------------------------

def orthogonal(key, shape, gain=1.0):
    return gain * jax.nn.initializers.orthogonal()(key, shape, jnp.float32)


def make_params(key, obs_shape, action_dim, hidden_dim,
                feature_dim, num_layers, num_filters):
    """Canonical (PyTorch-layout) parameters, weight_init semantics."""
    c, h, w = obs_shape
    keys = jax.random.split(key, 16)
    ki = iter(keys)
    gain_relu = math.sqrt(2.0)          # nn.init.calculate_gain('relu')

    conv_w, conv_b = [], []
    in_ch = c
    size = h
    for i in range(num_layers):
        wz = jnp.zeros((num_filters, in_ch, 3, 3), jnp.float32)
        center = orthogonal(next(ki), (num_filters, in_ch), gain_relu)
        wz = wz.at[:, :, 1, 1].set(center)
        conv_w.append(wz)
        conv_b.append(jnp.zeros((num_filters,), jnp.float32))
        stride = 2 if i == 0 else 1
        size = (size - 3) // stride + 1
        in_ch = num_filters
    flat_dim = num_filters * size * size

    enc = dict(
        conv_w=conv_w, conv_b=conv_b, out_size=size,
        fc_w=orthogonal(next(ki), (feature_dim, flat_dim)).T,   # (in, out), NCHW-flatten rows
        fc_b=jnp.zeros((1, feature_dim), jnp.float32),
        ln_g=jnp.ones((1, feature_dim), jnp.float32),
        ln_b=jnp.zeros((1, feature_dim), jnp.float32),
    )

    def make_q():
        w1 = orthogonal(next(ki), (hidden_dim, feature_dim + action_dim)).T  # (in, out)
        return dict(
            w1o=w1[:feature_dim], w1a=w1[feature_dim:],
            b1=jnp.zeros((1, hidden_dim), jnp.float32),
            w2=orthogonal(next(ki), (hidden_dim, hidden_dim)).T,
            b2=jnp.zeros((1, hidden_dim), jnp.float32),
            w3=orthogonal(next(ki), (1, hidden_dim)).T,
            b3=jnp.zeros((1, 1), jnp.float32),
        )

    return dict(enc=enc, q1=make_q(), q2=make_q())


def prepare_kernel_params(params, num_filters):
    """One-time conversion to kernel layouts: channel-last conv matmul weights
    (lane-padded to 128, /255 folded into conv1), fc rows permuted to NHWC
    flatten order, Q1/Q2 merged along lanes with block-diag W2 / padded W3."""
    enc = params["enc"]
    conv_w, conv_b = [], []
    for i, (cw, cb) in enumerate(zip(enc["conv_w"], enc["conv_b"])):
        f, c, k, _ = cw.shape
        wmat = cw.transpose(2, 3, 1, 0).reshape(k * k * c, f)   # col order (kh, kw, C)
        if i == 0:
            wmat = wmat / 255.0                                  # fold /255 (conv is linear)
        conv_w.append(jnp.pad(wmat, ((0, 0), (0, LANE - f))))
        conv_b.append(jnp.pad(cb.reshape(1, f), ((0, 0), (0, LANE - f))))

    s = enc["out_size"]
    feat_dim = enc["fc_w"].shape[1]
    fc_w = (enc["fc_w"].reshape(num_filters, s, s, feat_dim)     # NCHW-flat rows
            .transpose(1, 2, 0, 3).reshape(num_filters * s * s, feat_dim))  # -> NHWC-flat

    q1, q2 = params["q1"], params["q2"]
    hdim = q1["w2"].shape[0]
    w1o = jnp.concatenate([q1["w1o"], q2["w1o"]], axis=1)        # (feat, 2H)
    w1a = jnp.concatenate([q1["w1a"], q2["w1a"]], axis=1)        # (A, 2H)
    b1 = jnp.concatenate([q1["b1"], q2["b1"]], axis=1)
    w2 = jnp.zeros((2 * hdim, 2 * hdim), jnp.float32)
    w2 = w2.at[:hdim, :hdim].set(q1["w2"]).at[hdim:, hdim:].set(q2["w2"])
    b2 = jnp.concatenate([q1["b2"], q2["b2"]], axis=1)
    w3 = jnp.zeros((2 * hdim, LANE), jnp.float32)
    w3 = w3.at[:hdim, 0].set(q1["w3"][:, 0]).at[hdim:, 1].set(q2["w3"][:, 0])
    b3 = jnp.zeros((1, LANE), jnp.float32)
    b3 = b3.at[0, 0].set(q1["b3"][0, 0]).at[0, 1].set(q2["b3"][0, 0])

    return dict(conv_w=conv_w, conv_b=conv_b,
                fc_w=fc_w, fc_b=enc["fc_b"], ln_g=enc["ln_g"], ln_b=enc["ln_b"],
                w1o=w1o, w1a=w1a, b1=b1, w2=w2, b2=b2, w3=w3, b3=b3)


# ------------------------------ reference -----------------------------------

def reference_forward(params, obs, action):
    p = params["enc"]
    x = obs.astype(jnp.float32) / 255.0
    for i, (cw, cb) in enumerate(zip(p["conv_w"], p["conv_b"])):
        stride = (2, 2) if i == 0 else (1, 1)
        x = lax.conv_general_dilated(x, cw, stride, "VALID",
                                     dimension_numbers=("NCHW", "OIHW", "NCHW"))
        x = jax.nn.relu(x + cb[None, :, None, None])
    hflat = x.reshape(x.shape[0], -1)                   # NCHW flatten (torch .view)
    fc = hflat @ p["fc_w"] + p["fc_b"]
    mean = fc.mean(-1, keepdims=True)
    var = ((fc - mean) ** 2).mean(-1, keepdims=True)
    feat = (fc - mean) / jnp.sqrt(var + 1e-5) * p["ln_g"] + p["ln_b"]

    def q(pq):
        h1 = jax.nn.relu(feat @ pq["w1o"] + action @ pq["w1a"] + pq["b1"])
        h2 = jax.nn.relu(h1 @ pq["w2"] + pq["b2"])
        return h2 @ pq["w3"] + pq["b3"]

    return q(params["q1"]), q(params["q2"])


# --------------------------------- main --------------------------------------

if __name__ == "__main__":
    # Shapes consistent with Critic(obs_shape=(3,16,16), action_shape=(4,),
    # hidden_dim=32, encoder_feature_dim=32, num_layers=2, num_filters=8)
    OBS_SHAPE = (3, 16, 16)
    ACTION_DIM = 4
    HIDDEN_DIM = 32
    FEATURE_DIM = 32
    NUM_LAYERS = 2
    NUM_FILTERS = 8
    BATCH = 2

    key = jax.random.PRNGKey(0)
    kp, ko, ka = jax.random.split(key, 3)
    params = make_params(kp, OBS_SHAPE, ACTION_DIM, HIDDEN_DIM,
                         FEATURE_DIM, NUM_LAYERS, NUM_FILTERS)
    kparams = prepare_kernel_params(params, NUM_FILTERS)

    obs = jax.random.uniform(ko, (BATCH,) + OBS_SHAPE, jnp.float32,
                             minval=0.0, maxval=255.0)
    action = jax.random.normal(ka, (BATCH, ACTION_DIM), jnp.float32)

    critic_apply = jax.jit(functools.partial(critic_forward,
                                             num_filters=NUM_FILTERS))
    q1, q2 = critic_apply(kparams, obs, action)
    jax.block_until_ready((q1, q2))

    r1, r2 = reference_forward(params, obs, action)
    assert q1.shape == (BATCH, 1) and q2.shape == (BATCH, 1)
    assert jnp.allclose(q1, r1, atol=1e-4, rtol=1e-4)
    assert jnp.allclose(q2, r2, atol=1e-4, rtol=1e-4)

    print("KERNEL_OK")
</pallas_src>

<mosaic_0001>
module attributes {stable_mosaic.version = 11 : i64} {
  func.func @conv_mm_relu_kernel(%arg0: i32, %arg1: memref<104x27xf32, #tpu.memory_space<vmem>>, %arg2: memref<27x128xf32, #tpu.memory_space<vmem>>, %arg3: memref<1x128xf32, #tpu.memory_space<vmem>>, %arg4: memref<104x128xf32, #tpu.memory_space<vmem>>) attributes {dimension_semantics = [#tpu.dimension_semantics<parallel>], iteration_bounds = array<i64: 1>, scalar_prefetch = 0 : i64, scratch_operands = 0 : i64, tpu.core_type = #tpu.core_type<tc>, window_params = [{transform_indices = @transform_0, window_bounds = array<i64: 104, 27>}, {pipeline_mode = #tpu.pipeline_mode<synchronous>, transform_indices = @transform_1, window_bounds = array<i64: 27, 128>}, {pipeline_mode = #tpu.pipeline_mode<synchronous>, transform_indices = @transform_2, window_bounds = array<i64: 1, 128>}, {transform_indices = @transform_3, window_bounds = array<i64: 104, 128>}]} {
    %c0 = arith.constant 0 : index
    %c0_0 = arith.constant 0 : index
    %0 = vector.load %arg1[%c0, %c0_0] : memref<104x27xf32, #tpu.memory_space<vmem>>, vector<104x27xf32>
    %c0_1 = arith.constant 0 : index
    %c0_2 = arith.constant 0 : index
    %1 = vector.load %arg2[%c0_1, %c0_2] : memref<27x128xf32, #tpu.memory_space<vmem>>, vector<27x128xf32>
    %cst = arith.constant dense<0.000000e+00> : vector<104x128xf32>
    %2 = tpu.matmul %0, %1, %cst {dimension_numbers = #tpu.dot_dimension_numbers<[1], [0], [0], [1], [0, 0, 1, 1], [], []>} : vector<104x27xf32>, vector<27x128xf32>, vector<104x128xf32> -> vector<104x128xf32>
    %c0_3 = arith.constant 0 : index
    %c0_4 = arith.constant 0 : index
    %3 = vector.load %arg3[%c0_3, %c0_4] : memref<1x128xf32, #tpu.memory_space<vmem>>, vector<1x128xf32>
    %4 = vector.broadcast %3 : vector<1x128xf32> to vector<104x128xf32>
    %5 = arith.addf %2, %4 : vector<104x128xf32>
    %cst_5 = arith.constant 0.000000e+00 : f32
    %6 = vector.broadcast %cst_5 : f32 to vector<104x128xf32>
    %7 = arith.maximumf %5, %6 : vector<104x128xf32>
    %c0_6 = arith.constant 0 : index
    %c0_7 = arith.constant 0 : index
    %8 = vector.load %arg4[%c0_6, %c0_7] : memref<104x128xf32, #tpu.memory_space<vmem>>, vector<104x128xf32>
    tpu.vector_store %arg4[%c0_6, %c0_7], %7 {strides = array<i32>} : memref<104x128xf32, #tpu.memory_space<vmem>>, vector<104x128xf32>,
    return
  }
  func.func @transform_0(%arg0: i32) -> (i32, i32) {
    %c0_i32 = arith.constant 0 : i32
    %c0_i32_0 = arith.constant 0 : i32
    return %arg0, %c0_i32 : i32, i32
  }
  func.func @transform_1(%arg0: i32) -> (i32, i32) {
    %c0_i32 = arith.constant 0 : i32
    %c0_i32_0 = arith.constant 0 : i32
    %c0_i32_1 = arith.constant 0 : i32
    return %c0_i32, %c0_i32_0 : i32, i32
  }
  func.func @transform_2(%arg0: i32) -> (i32, i32) {
    %c0_i32 = arith.constant 0 : i32
    %c0_i32_0 = arith.constant 0 : i32
    %c0_i32_1 = arith.constant 0 : i32
    return %c0_i32, %c0_i32_0 : i32, i32
  }
  func.func @transform_3(%arg0: i32) -> (i32, i32) {
    %c0_i32 = arith.constant 0 : i32
    %c0_i32_0 = arith.constant 0 : i32
    return %arg0, %c0_i32 : i32, i32
  }
}

module attributes {stable_mosaic.version = 11 : i64} {
  func.func @conv_mm_relu_kernel(%arg0: i32, %arg1: memref<56x72xf32, #tpu.memory_space<vmem>>, %arg2: memref<72x128xf32, #tpu.memory_space<vmem>>, %arg3: memref<1x128xf32, #tpu.memory_space<vmem>>, %arg4: memref<56x128xf32, #tpu.memory_space<vmem>>) attributes {dimension_semantics = [#tpu.dimension_semantics<parallel>], iteration_bounds = array<i64: 1>, scalar_prefetch = 0 : i64, scratch_operands = 0 : i64, tpu.core_type = #tpu.core_type<tc>, window_params = [{transform_indices = @transform_0, window_bounds = array<i64: 56, 72>}, {pipeline_mode = #tpu.pipeline_mode<synchronous>, transform_indices = @transform_1, window_bounds = array<i64: 72, 128>}, {pipeline_mode = #tpu.pipeline_mode<synchronous>, transform_indices = @transform_2, window_bounds = array<i64: 1, 128>}, {transform_indices = @transform_3, window_bounds = array<i64: 56, 128>}]} {
    %c0 = arith.constant 0 : index
    %c0_0 = arith.constant 0 : index
    %0 = vector.load %arg1[%c0, %c0_0] : memref<56x72xf32, #tpu.memory_space<vmem>>, vector<56x72xf32>
    %c0_1 = arith.constant 0 : index
    %c0_2 = arith.constant 0 : index
    %1 = vector.load %arg2[%c0_1, %c0_2] : memref<72x128xf32, #tpu.memory_space<vmem>>, vector<72x128xf32>
    %cst = arith.constant dense<0.000000e+00> : vector<56x128xf32>
    %2 = tpu.matmul %0, %1, %cst {dimension_numbers = #tpu.dot_dimension_numbers<[1], [0], [0], [1], [0, 0, 1, 1], [], []>} : vector<56x72xf32>, vector<72x128xf32>, vector<56x128xf32> -> vector<56x128xf32>
    %c0_3 = arith.constant 0 : index
    %c0_4 = arith.constant 0 : index
    %3 = vector.load %arg3[%c0_3, %c0_4] : memref<1x128xf32, #tpu.memory_space<vmem>>, vector<1x128xf32>
    %4 = vector.broadcast %3 : vector<1x128xf32> to vector<56x128xf32>
    %5 = arith.addf %2, %4 : vector<56x128xf32>
    %cst_5 = arith.constant 0.000000e+00 : f32
    %6 = vector.broadcast %cst_5 : f32 to vector<56x128xf32>
    %7 = arith.maximumf %5, %6 : vector<56x128xf32>
    %c0_6 = arith.constant 0 : index
    %c0_7 = arith.constant 0 : index
    %8 = vector.load %arg4[%c0_6, %c0_7] : memref<56x128xf32, #tpu.memory_space<vmem>>, vector<56x128xf32>
    tpu.vector_store %arg4[%c0_6, %c0_7], %7 {strides = array<i32>} : memref<56x128xf32, #tpu.memory_space<vmem>>, vector<56x128xf32>,
    return
  }
  func.func @transform_0(%arg0: i32) -> (i32, i32) {
    %c0_i32 = arith.constant 0 : i32
    %c0_i32_0 = arith.constant 0 : i32
    return %arg0, %c0_i32 : i32, i32
  }
  func.func @transform_1(%arg0: i32) -> (i32, i32) {
    %c0_i32 = arith.constant 0 : i32
    %c0_i32_0 = arith.constant 0 : i32
    %c0_i32_1 = arith.constant 0 : i32
    return %c0_i32, %c0_i32_0 : i32, i32
  }
  func.func @transform_2(%arg0: i32) -> (i32, i32) {
    %c0_i32 = arith.constant 0 : i32
    %c0_i32_0 = arith.constant 0 : i32
    %c0_i32_1 = arith.constant 0 : i32
    return %c0_i32, %c0_i32_0 : i32, i32
  }
  func.func @transform_3(%arg0: i32) -> (i32, i32) {
    %c0_i32 = arith.constant 0 : i32
    %c0_i32_0 = arith.constant 0 : i32
    return %arg0, %c0_i32 : i32, i32
  }
}

module attributes {stable_mosaic.version = 11 : i64} {
  func.func @head_kernel(%arg0: i32, %arg1: memref<8x200xf32, #tpu.memory_space<vmem>>, %arg2: memref<8x4xf32, #tpu.memory_space<vmem>>, %arg3: memref<200x32xf32, #tpu.memory_space<vmem>>, %arg4: memref<1x32xf32, #tpu.memory_space<vmem>>, %arg5: memref<1x32xf32, #tpu.memory_space<vmem>>, %arg6: memref<1x32xf32, #tpu.memory_space<vmem>>, %arg7: memref<32x64xf32, #tpu.memory_space<vmem>>, %arg8: memref<4x64xf32, #tpu.memory_space<vmem>>, %arg9: memref<1x64xf32, #tpu.memory_space<vmem>>, %arg10: memref<64x64xf32, #tpu.memory_space<vmem>>, %arg11: memref<1x64xf32, #tpu.memory_space<vmem>>, %arg12: memref<64x128xf32, #tpu.memory_space<vmem>>, %arg13: memref<1x128xf32, #tpu.memory_space<vmem>>, %arg14: memref<8x128xf32, #tpu.memory_space<vmem>>) attributes {dimension_semantics = [#tpu.dimension_semantics<parallel>], iteration_bounds = array<i64: 1>, scalar_prefetch = 0 : i64, scratch_operands = 0 : i64, tpu.core_type = #tpu.core_type<tc>, window_params = [{transform_indices = @transform_0, window_bounds = array<i64: 8, 200>}, {transform_indices = @transform_1, window_bounds = array<i64: 8, 4>}, {pipeline_mode = #tpu.pipeline_mode<synchronous>, transform_indices = @transform_2, window_bounds = array<i64: 200, 32>}, {pipeline_mode = #tpu.pipeline_mode<synchronous>, transform_indices = @transform_3, window_bounds = array<i64: 1, 32>}, {pipeline_mode = #tpu.pipeline_mode<synchronous>, transform_indices = @transform_4, window_bounds = array<i64: 1, 32>}, {pipeline_mode = #tpu.pipeline_mode<synchronous>, transform_indices = @transform_5, window_bounds = array<i64: 1, 32>}, {pipeline_mode = #tpu.pipeline_mode<synchronous>, transform_indices = @transform_6, window_bounds = array<i64: 32, 64>}, {pipeline_mode = #tpu.pipeline_mode<synchronous>, transform_indices = @transform_7, window_bounds = array<i64: 4, 64>}, {pipeline_mode = #tpu.pipeline_mode<synchronous>, transform_indices = @transform_8, window_bounds = array<i64: 1, 64>}, {pipeline_mode = #tpu.pipeline_mode<synchronous>, transform_indices = @transform_9, window_bounds = array<i64: 64, 64>}, {pipeline_mode = #tpu.pipeline_mode<synchronous>, transform_indices = @transform_10, window_bounds = array<i64: 1, 64>}, {pipeline_mode = #tpu.pipeline_mode<synchronous>, transform_indices = @transform_11, window_bounds = array<i64: 64, 128>}, {pipeline_mode = #tpu.pipeline_mode<synchronous>, transform_indices = @transform_12, window_bounds = array<i64: 1, 128>}, {transform_indices = @transform_13, window_bounds = array<i64: 8, 128>}]} {
    %c0 = arith.constant 0 : index
    %c0_0 = arith.constant 0 : index
    %0 = vector.load %arg1[%c0, %c0_0] : memref<8x200xf32, #tpu.memory_space<vmem>>, vector<8x200xf32>
    %c0_1 = arith.constant 0 : index
    %c0_2 = arith.constant 0 : index
    %1 = vector.load %arg3[%c0_1, %c0_2] : memref<200x32xf32, #tpu.memory_space<vmem>>, vector<200x32xf32>
    %cst = arith.constant dense<0.000000e+00> : vector<8x32xf32>
    %2 = tpu.matmul %0, %1, %cst {dimension_numbers = #tpu.dot_dimension_numbers<[1], [0], [0], [1], [0, 0, 1, 1], [], []>} : vector<8x200xf32>, vector<200x32xf32>, vector<8x32xf32> -> vector<8x32xf32>
    %c0_3 = arith.constant 0 : index
    %c0_4 = arith.constant 0 : index
    %3 = vector.load %arg4[%c0_3, %c0_4] : memref<1x32xf32, #tpu.memory_space<vmem>>, vector<1x32xf32>
    %4 = vector.broadcast %3 : vector<1x32xf32> to vector<8x32xf32>
    %5 = arith.addf %2, %4 : vector<8x32xf32>
    %cst_5 = arith.constant dense<0.000000e+00> : vector<8xf32>
    %6 = vector.multi_reduction <add>, %5, %cst_5 [1] : vector<8x32xf32> to vector<8xf32>
    %7 = vector.shape_cast %6 : vector<8xf32> to vector<8x1xf32>
    %cst_6 = arith.constant 3.200000e+01 : f32
    %8 = vector.broadcast %cst_6 : f32 to vector<8x1xf32>
    %9 = arith.divf %7, %8 : vector<8x1xf32>
    %10 = vector.broadcast %9 : vector<8x1xf32> to vector<8x32xf32>
    %11 = arith.subf %5, %10 : vector<8x32xf32>
    %12 = arith.mulf %11, %11 : vector<8x32xf32>
    %cst_7 = arith.constant dense<0.000000e+00> : vector<8xf32>
    %13 = vector.multi_reduction <add>, %12, %cst_7 [1] : vector<8x32xf32> to vector<8xf32>
    %14 = vector.shape_cast %13 : vector<8xf32> to vector<8x1xf32>
    %cst_8 = arith.constant 3.200000e+01 : f32
    %15 = vector.broadcast %cst_8 : f32 to vector<8x1xf32>
    %16 = arith.divf %14, %15 : vector<8x1xf32>
    %17 = vector.broadcast %9 : vector<8x1xf32> to vector<8x32xf32>
    %18 = arith.subf %5, %17 : vector<8x32xf32>
    %cst_9 = arith.constant 9.99999974E-6 : f32
    %19 = vector.broadcast %cst_9 : f32 to vector<8x1xf32>
    %20 = arith.addf %16, %19 : vector<8x1xf32>
    %21 = math.rsqrt %20 : vector<8x1xf32>
    %22 = vector.broadcast %21 : vector<8x1xf32> to vector<8x32xf32>
    %23 = arith.mulf %18, %22 : vector<8x32xf32>
    %c0_10 = arith.constant 0 : index
    %c0_11 = arith.constant 0 : index
    %24 = vector.load %arg5[%c0_10, %c0_11] : memref<1x32xf32, #tpu.memory_space<vmem>>, vector<1x32xf32>
    %25 = vector.broadcast %24 : vector<1x32xf32> to vector<8x32xf32>
    %26 = arith.mulf %23, %25 : vector<8x32xf32>
    %c0_12 = arith.constant 0 : index
    %c0_13 = arith.constant 0 : index
    %27 = vector.load %arg6[%c0_12, %c0_13] : memref<1x32xf32, #tpu.memory_space<vmem>>, vector<1x32xf32>
    %28 = vector.broadcast %27 : vector<1x32xf32> to vector<8x32xf32>
    %29 = arith.addf %26, %28 : vector<8x32xf32>
    %c0_14 = arith.constant 0 : index
    %c0_15 = arith.constant 0 : index
    %30 = vector.load %arg7[%c0_14, %c0_15] : memref<32x64xf32, #tpu.memory_space<vmem>>, vector<32x64xf32>
    %cst_16 = arith.constant dense<0.000000e+00> : vector<8x64xf32>
    %31 = tpu.matmul %29, %30, %cst_16 {dimension_numbers = #tpu.dot_dimension_numbers<[1], [0], [0], [1], [0, 0, 1, 1], [], []>} : vector<8x32xf32>, vector<32x64xf32>, vector<8x64xf32> -> vector<8x64xf32>
    %c0_17 = arith.constant 0 : index
    %c0_18 = arith.constant 0 : index
    %32 = vector.load %arg2[%c0_17, %c0_18] : memref<8x4xf32, #tpu.memory_space<vmem>>, vector<8x4xf32>
    %c0_19 = arith.constant 0 : index
    %c0_20 = arith.constant 0 : index
    %33 = vector.load %arg8[%c0_19, %c0_20] : memref<4x64xf32, #tpu.memory_space<vmem>>, vector<4x64xf32>
    %cst_21 = arith.constant dense<0.000000e+00> : vector<8x64xf32>
    %34 = tpu.matmul %32, %33, %cst_21 {dimension_numbers = #tpu.dot_dimension_numbers<[1], [0], [0], [1], [0, 0, 1, 1], [], []>} : vector<8x4xf32>, vector<4x64xf32>, vector<8x64xf32> -> vector<8x64xf32>
    %35 = arith.addf %31, %34 : vector<8x64xf32>
    %c0_22 = arith.constant 0 : index
    %c0_23 = arith.constant 0 : index
    %36 = vector.load %arg9[%c0_22, %c0_23] : memref<1x64xf32, #tpu.memory_space<vmem>>, vector<1x64xf32>
    %37 = vector.broadcast %36 : vector<1x64xf32> to vector<8x64xf32>
    %38 = arith.addf %35, %37 : vector<8x64xf32>
    %cst_24 = arith.constant 0.000000e+00 : f32
    %39 = vector.broadcast %cst_24 : f32 to vector<8x64xf32>
    %40 = arith.maximumf %38, %39 : vector<8x64xf32>
    %c0_25 = arith.constant 0 : index
    %c0_26 = arith.constant 0 : index
    %41 = vector.load %arg10[%c0_25, %c0_26] : memref<64x64xf32, #tpu.memory_space<vmem>>, vector<64x64xf32>
    %cst_27 = arith.constant dense<0.000000e+00> : vector<8x64xf32>
    %42 = tpu.matmul %40, %41, %cst_27 {dimension_numbers = #tpu.dot_dimension_numbers<[1], [0], [0], [1], [0, 0, 1, 1], [], []>} : vector<8x64xf32>, vector<64x64xf32>, vector<8x64xf32> -> vector<8x64xf32>
    %c0_28 = arith.constant 0 : index
    %c0_29 = arith.constant 0 : index
    %43 = vector.load %arg11[%c0_28, %c0_29] : memref<1x64xf32, #tpu.memory_space<vmem>>, vector<1x64xf32>
    %44 = vector.broadcast %43 : vector<1x64xf32> to vector<8x64xf32>
    %45 = arith.addf %42, %44 : vector<8x64xf32>
    %cst_30 = arith.constant 0.000000e+00 : f32
    %46 = vector.broadcast %cst_30 : f32 to vector<8x64xf32>
    %47 = arith.maximumf %45, %46 : vector<8x64xf32>
    %c0_31 = arith.constant 0 : index
    %c0_32 = arith.constant 0 : index
    %48 = vector.load %arg12[%c0_31, %c0_32] : memref<64x128xf32, #tpu.memory_space<vmem>>, vector<64x128xf32>
    %cst_33 = arith.constant dense<0.000000e+00> : vector<8x128xf32>
    %49 = tpu.matmul %47, %48, %cst_33 {dimension_numbers = #tpu.dot_dimension_numbers<[1], [0], [0], [1], [0, 0, 1, 1], [], []>} : vector<8x64xf32>, vector<64x128xf32>, vector<8x128xf32> -> vector<8x128xf32>
    %c0_34 = arith.constant 0 : index
    %c0_35 = arith.constant 0 : index
    %50 = vector.load %arg13[%c0_34, %c0_35] : memref<1x128xf32, #tpu.memory_space<vmem>>, vector<1x128xf32>
    %51 = vector.broadcast %50 : vector<1x128xf32> to vector<8x128xf32>
    %52 = arith.addf %49, %51 : vector<8x128xf32>
    %c0_36 = arith.constant 0 : index
    %c0_37 = arith.constant 0 : index
    %53 = vector.load %arg14[%c0_36, %c0_37] : memref<8x128xf32, #tpu.memory_space<vmem>>, vector<8x128xf32>
    tpu.vector_store %arg14[%c0_36, %c0_37], %52 {strides = array<i32>} : memref<8x128xf32, #tpu.memory_space<vmem>>, vector<8x128xf32>,
    return
  }
  func.func @transform_0(%arg0: i32) -> (i32, i32) {
    %c0_i32 = arith.constant 0 : i32
    %c0_i32_0 = arith.constant 0 : i32
    return %arg0, %c0_i32 : i32, i32
  }
  func.func @transform_1(%arg0: i32) -> (i32, i32) {
    %c0_i32 = arith.constant 0 : i32
    %c0_i32_0 = arith.constant 0 : i32
    return %arg0, %c0_i32 : i32, i32
  }
  func.func @transform_2(%arg0: i32) -> (i32, i32) {
    %c0_i32 = arith.constant 0 : i32
    %c0_i32_0 = arith.constant 0 : i32
    %c0_i32_1 = arith.constant 0 : i32
    return %c0_i32, %c0_i32_0 : i32, i32
  }
  func.func @transform_3(%arg0: i32) -> (i32, i32) {
    %c0_i32 = arith.constant 0 : i32
    %c0_i32_0 = arith.constant 0 : i32
    %c0_i32_1 = arith.constant 0 : i32
    return %c0_i32, %c0_i32_0 : i32, i32
  }
  func.func @transform_4(%arg0: i32) -> (i32, i32) {
    %c0_i32 = arith.constant 0 : i32
    %c0_i32_0 = arith.constant 0 : i32
    %c0_i32_1 = arith.constant 0 : i32
    return %c0_i32, %c0_i32_0 : i32, i32
  }
  func.func @transform_5(%arg0: i32) -> (i32, i32) {
    %c0_i32 = arith.constant 0 : i32
    %c0_i32_0 = arith.constant 0 : i32
    %c0_i32_1 = arith.constant 0 : i32
    return %c0_i32, %c0_i32_0 : i32, i32
  }
  func.func @transform_6(%arg0: i32) -> (i32, i32) {
    %c0_i32 = arith.constant 0 : i32
    %c0_i32_0 = arith.constant 0 : i32
    %c0_i32_1 = arith.constant 0 : i32
    return %c0_i32, %c0_i32_0 : i32, i32
  }
  func.func @transform_7(%arg0: i32) -> (i32, i32) {
    %c0_i32 = arith.constant 0 : i32
    %c0_i32_0 = arith.constant 0 : i32
    %c0_i32_1 = arith.constant 0 : i32
    return %c0_i32, %c0_i32_0 : i32, i32
  }
  func.func @transform_8(%arg0: i32) -> (i32, i32) {
    %c0_i32 = arith.constant 0 : i32
    %c0_i32_0 = arith.constant 0 : i32
    %c0_i32_1 = arith.constant 0 : i32
    return %c0_i32, %c0_i32_0 : i32, i32
  }
  func.func @transform_9(%arg0: i32) -> (i32, i32) {
    %c0_i32 = arith.constant 0 : i32
    %c0_i32_0 = arith.constant 0 : i32
    %c0_i32_1 = arith.constant 0 : i32
    return %c0_i32, %c0_i32_0 : i32, i32
  }
  func.func @transform_10(%arg0: i32) -> (i32, i32) {
    %c0_i32 = arith.constant 0 : i32
    %c0_i32_0 = arith.constant 0 : i32
    %c0_i32_1 = arith.constant 0 : i32
    return %c0_i32, %c0_i32_0 : i32, i32
  }
  func.func @transform_11(%arg0: i32) -> (i32, i32) {
    %c0_i32 = arith.constant 0 : i32
    %c0_i32_0 = arith.constant 0 : i32
    %c0_i32_1 = arith.constant 0 : i32
    return %c0_i32, %c0_i32_0 : i32, i32
  }
  func.func @transform_12(%arg0: i32) -> (i32, i32) {
    %c0_i32 = arith.constant 0 : i32
    %c0_i32_0 = arith.constant 0 : i32
    %c0_i32_1 = arith.constant 0 : i32
    return %c0_i32, %c0_i32_0 : i32, i32
  }
  func.func @transform_13(%arg0: i32) -> (i32, i32) {
    %c0_i32 = arith.constant 0 : i32
    %c0_i32_0 = arith.constant 0 : i32
    return %arg0, %c0_i32 : i32, i32
  }
}

</mosaic_0001>

<llo_original>
// kernel: critic_forward.3
$region0: #{critic_forward.3}
  #allocation0 [shape = 'u32[]', space=smem, size = 0x4, offset = 0x4, fixed_abs, tag = 'smem constant byte address 0x4 - core index']
  #allocation1 [shape = 'u32[144,128]{1,0:T(1,128)}', space=vmem, size = 0x12000, scoped, tag = 'internal scratch']
  %s0 = inlined_call_operand.vmem [shape: f32[104,27], index: 0, kind: input, shape index: {}]
  %s1 = inlined_call_operand.vmem [shape: f32[27,128], index: 1, kind: input, shape index: {}]
  %s2 = inlined_call_operand.vmem [shape: f32[1,128], index: 2, kind: input, shape index: {}]
  %s3 = inlined_call_operand.vmem [shape: f32[104,128], index: 3, kind: output, shape index: {}]
  %s4 = sld [smem:[#allocation0]]
  $region22: #{critic_forward.3} parent=0
    _
  %s6 = ssub.s32 1, %s4
  %s7 = scalar_select 0, %s6, %s4
  // Predicated region
  $region2: #{critic_forward.3} parent=0 // pred_check
    _
  $region3: #{critic_forward.3} parent=0 // pred_check_branch
    %9 = sbr.rel (0) target = $region5
  $region4: #{critic_forward.3} parent=0 // pred_region
    _
  $region5: #{critic_forward.3} parent=0 // pred_fallthru
    _
  // Predicated region
  $region6: #{critic_forward.3} parent=0 // pred_check
    _
  $region7: #{critic_forward.3} parent=0 // pred_check_branch
    %11 = sbr.rel (0) target = $region9
  $region8: #{critic_forward.3} parent=0 // pred_region
    _
  $region9: #{critic_forward.3} parent=0 // pred_fallthru
    _
  // Predicated region
  $region10: #{critic_forward.3} parent=0 // pred_check
    _
  $region11: #{critic_forward.3} parent=0 // pred_check_branch
    %13 = sbr.rel (0) target = $region13
  $region12: #{critic_forward.3} parent=0 // pred_region
    _
  $region13: #{critic_forward.3} parent=0 // pred_fallthru
    _
  %v14 = vld [vmem:[%s0] sm:$0xff]
  %v15 = vld [vmem:[%s0 + $0x8] sm:$0xff]
  %v16 = vld [vmem:[%s0 + $0x10] sm:$0xff]
  %v17 = vld [vmem:[%s0 + $0x18] sm:$0xff]
  %v18 = vld [vmem:[%s0 + $0x20] sm:$0xff]
  %v19 = vld [vmem:[%s0 + $0x28] sm:$0xff]
  %v20 = vld [vmem:[%s0 + $0x30] sm:$0xff]
  %v21 = vld [vmem:[%s0 + $0x38] sm:$0xff]
  %v22 = vld [vmem:[%s0 + $0x40] sm:$0xff]
  %v23 = vld [vmem:[%s0 + $0x48] sm:$0xff]
  %v24 = vld [vmem:[%s0 + $0x50] sm:$0xff]
  %v25 = vld [vmem:[%s0 + $0x58] sm:$0xff]
  %v26 = vld [vmem:[%s0 + $0x60] sm:$0xff]
  %v27 = vld [vmem:[%s1] sm:$0xff]
  %v28 = vld [vmem:[%s1 + $0x8] sm:$0xff]
  %v29 = vld [vmem:[%s1 + $0x10] sm:$0xff]
  %v30 = vld [vmem:[%s1 + $0x18] sm:$0x7]
  %v31 = vld [vmem:[%s2] sm:$0x1]
  %v33 = vlaneseq
  %v34 = vshrl.u32 %v33, 7
  %v35 = vsub.s32 0, %v34
  %v36 = vrot.slane %v31, %v35
  %vm38 = vcmask 220160
  %v40 = vsel %vm38, %v14, 0
  %v43 = vsel %vm38, %v15, 0
  %v46 = vsel %vm38, %v16, 0
  %v49 = vsel %vm38, %v17, 0
  %v52 = vsel %vm38, %v18, 0
  %v55 = vsel %vm38, %v19, 0
  %v58 = vsel %vm38, %v20, 0
  %v61 = vsel %vm38, %v21, 0
  %v64 = vsel %vm38, %v22, 0
  %v67 = vsel %vm38, %v23, 0
  %v70 = vsel %vm38, %v24, 0
  %v73 = vsel %vm38, %v25, 0
  %v76 = vsel %vm38, %v26, 0
  %vm78 = vcmask 1042432
  %v80 = vsel %vm78, %v30, 0
  %82 = vmatprep.subr.mxu0 0.0
  %83 = vmatpush1.msra.mxu0 0.0
  %84 = vmatprep.subr.mxu0 0.0
  %85 = vmatpush1.msra.mxu0 0.0
  %86 = vmatprep.subr.mxu0 0.0
  %87 = vmatpush1.msra.mxu0 0.0
  %88 = vmatprep.subr.mxu0 0.0
  %89 = vmatpush1.msra.mxu0 0.0
  %90 = vmatprep.subr.mxu0 0.0
  %91 = vmatpush1.msra.mxu0 0.0
  %92 = vmatprep.subr.mxu0 0.0
  %93 = vmatpush1.msra.mxu0 0.0
  %94 = vmatprep.subr.mxu0 0.0
  %95 = vmatpush1.msra.mxu0 0.0
  %96 = vmatprep.subr.mxu0 0.0
  %97 = vmatpush1.msra.mxu0 0.0
  %98 = vmatprep.subr.mxu0 0.0
  %99 = vmatpush1.msra.mxu0 0.0
  %100 = vmatprep.subr.mxu0 0.0
  %101 = vmatpush1.msra.mxu0 0.0
  %102 = vmatprep.subr.mxu0 0.0
  %103 = vmatpush1.msra.mxu0 0.0
  %104 = vmatprep.subr.mxu0 0.0
  %105 = vmatpush1.msra.mxu0 0.0
  %106 = vmatprep.subr.mxu0 0.0
  %107 = vmatpush1.msra.mxu0 %v80
  %108 = vmatprep.subr.mxu0 0.0
  %109 = vmatpush1.msra.mxu0 %v29
  %110 = vmatprep.subr.mxu0 0.0
  %111 = vmatpush1.msra.mxu0 %v28
  %112 = vmatprep.subr.mxu0 0.0
  %113 = vmatpush1.msra.mxu0 %v27
  %114 = vmatprep.subr.mxu0 0.0
  %115 = vmatpush2.msra.mxu0 0.0
  %116 = vmatprep.subr.mxu0 0.0
  %117 = vmatpush2.msra.mxu0 0.0
  %118 = vmatprep.subr.mxu0 0.0
  %119 = vmatpush2.msra.mxu0 0.0
  %120 = vmatprep.subr.mxu0 0.0
  %121 = vmatpush2.msra.mxu0 0.0
  %122 = vmatprep.subr.mxu0 0.0
  %123 = vmatpush2.msra.mxu0 0.0
  %124 = vmatprep.subr.mxu0 0.0
  %125 = vmatpush2.msra.mxu0 0.0
  %126 = vmatprep.subr.mxu0 0.0
  %127 = vmatpush2.msra.mxu0 0.0
  %128 = vmatprep.subr.mxu0 0.0
  %129 = vmatpush2.msra.mxu0 0.0
  %130 = vmatprep.subr.mxu0 0.0
  %131 = vmatpush2.msra.mxu0 0.0
  %132 = vmatprep.subr.mxu0 0.0
  %133 = vmatpush2.msra.mxu0 0.0
  %134 = vmatprep.subr.mxu0 0.0
  %135 = vmatpush2.msra.mxu0 0.0
  %136 = vmatprep.subr.mxu0 0.0
  %137 = vmatpush2.msra.mxu0 0.0
  %138 = vmatprep.subr.mxu0 0.0
  %139 = vmatpush2.msra.mxu0 0.0
  %140 = vmatprep.subr.mxu0 0.0
  %141 = vmatpush2.msra.mxu0 0.0
  %142 = vmatprep.subr.mxu0 0.0
  %143 = vmatpush2.msra.mxu0 0.0
  %144 = vmatprep.subr.mxu0 0.0
  %145 = vmatpush2.msra.mxu0 0.0
  %146 = vmatprep.mubr.f32.mxu0 0.0
  %147 = vmatmul.mubr.f32.gmra.mxu0 %v40
  %v148 = vpop.f32.mrf.mxu0
  %v149 = vadd.f32 %v36, %v148
  %v150 = vpop.f32.mrf.mxu0
  %151 = vmatprep.mubr.f32.mxu0 0.0
  %152 = vmatmul.mubr.f32.gmra.mxu0 %v43
  %v153 = vpop.f32.mrf.mxu0
  %v154 = vadd.f32 %v36, %v153
  %v155 = vpop.f32.mrf.mxu0
  %156 = vmatprep.mubr.f32.mxu0 0.0
  %157 = vmatmul.mubr.f32.gmra.mxu0 %v46
  %v158 = vpop.f32.mrf.mxu0
  %v159 = vadd.f32 %v36, %v158
  %v160 = vpop.f32.mrf.mxu0
  %161 = vmatprep.mubr.f32.mxu0 0.0
  %162 = vmatmul.mubr.f32.gmra.mxu0 %v49
  %v163 = vpop.f32.mrf.mxu0
  %v164 = vadd.f32 %v36, %v163
  %v165 = vpop.f32.mrf.mxu0
  %166 = vmatprep.mubr.f32.mxu0 0.0
  %167 = vmatmul.mubr.f32.gmra.mxu0 %v52
  %v168 = vpop.f32.mrf.mxu0
  %v169 = vadd.f32 %v36, %v168
  %v170 = vpop.f32.mrf.mxu0
  %171 = vmatprep.mubr.f32.mxu0 0.0
  %172 = vmatmul.mubr.f32.gmra.mxu0 %v55
  %v173 = vpop.f32.mrf.mxu0
  %v174 = vadd.f32 %v36, %v173
  %v175 = vpop.f32.mrf.mxu0
  %176 = vmatprep.mubr.f32.mxu0 0.0
  %177 = vmatmul.mubr.f32.gmra.mxu0 %v58
  %v178 = vpop.f32.mrf.mxu0
  %v179 = vadd.f32 %v36, %v178
  %v180 = vpop.f32.mrf.mxu0
  %181 = vmatprep.mubr.f32.mxu0 0.0
  %182 = vmatmul.mubr.f32.gmra.mxu0 %v61
  %v183 = vpop.f32.mrf.mxu0
  %v184 = vadd.f32 %v36, %v183
  %v185 = vpop.f32.mrf.mxu0
  %186 = vmatprep.mubr.f32.mxu0 0.0
  %187 = vmatmul.mubr.f32.gmra.mxu0 %v64
  %v188 = vpop.f32.mrf.mxu0
  %v189 = vadd.f32 %v36, %v188
  %v190 = vpop.f32.mrf.mxu0
  %191 = vmatprep.mubr.f32.mxu0 0.0
  %192 = vmatmul.mubr.f32.gmra.mxu0 %v67
  %v193 = vpop.f32.mrf.mxu0
  %v194 = vadd.f32 %v36, %v193
  %v195 = vpop.f32.mrf.mxu0
  %196 = vmatprep.mubr.f32.mxu0 0.0
  %197 = vmatmul.mubr.f32.gmra.mxu0 %v70
  %v198 = vpop.f32.mrf.mxu0
  %v199 = vadd.f32 %v36, %v198
  %v200 = vpop.f32.mrf.mxu0
  %201 = vmatprep.mubr.f32.mxu0 0.0
  %202 = vmatmul.mubr.f32.gmra.mxu0 %v73
  %v203 = vpop.f32.mrf.mxu0
  %v204 = vadd.f32 %v36, %v203
  %v205 = vpop.f32.mrf.mxu0
  %206 = vmatprep.mubr.f32.mxu0 0.0
  %207 = vmatmul.mubr.f32.gmra.mxu0 %v76
  %v208 = vpop.f32.mrf.mxu0
  %v209 = vadd.f32 %v36, %v208
  %v210 = vpop.f32.mrf.mxu0
  %211 = vdwg.mxu0
  %v212 = vmax.f32 %v149, 0.0
  %v213 = vmax.f32 %v154, 0.0
  %v214 = vmax.f32 %v159, 0.0
  %v215 = vmax.f32 %v164, 0.0
  %v216 = vmax.f32 %v169, 0.0
  %v217 = vmax.f32 %v174, 0.0
  %v218 = vmax.f32 %v179, 0.0
  %v219 = vmax.f32 %v184, 0.0
  %v220 = vmax.f32 %v189, 0.0
  %v221 = vmax.f32 %v194, 0.0
  %v222 = vmax.f32 %v199, 0.0
  %v223 = vmax.f32 %v204, 0.0
  %v224 = vmax.f32 %v209, 0.0
  %225 = vst [vmem:[%s3] sm:$0xff] %v212
  %226 = vst [vmem:[%s3 + $0x8] sm:$0xff] %v213
  %227 = vst [vmem:[%s3 + $0x10] sm:$0xff] %v214
  %228 = vst [vmem:[%s3 + $0x18] sm:$0xff] %v215
  %229 = vst [vmem:[%s3 + $0x20] sm:$0xff] %v216
  %230 = vst [vmem:[%s3 + $0x28] sm:$0xff] %v217
  %231 = vst [vmem:[%s3 + $0x30] sm:$0xff] %v218
  %232 = vst [vmem:[%s3 + $0x38] sm:$0xff] %v219
  %233 = vst [vmem:[%s3 + $0x40] sm:$0xff] %v220
  %234 = vst [vmem:[%s3 + $0x48] sm:$0xff] %v221
  %235 = vst [vmem:[%s3 + $0x50] sm:$0xff] %v222
  %236 = vst [vmem:[%s3 + $0x58] sm:$0xff] %v223
  %237 = vst [vmem:[%s3 + $0x60] sm:$0xff] %v224
  // Predicated region
  $region14: #{critic_forward.3} parent=0 // pred_check
    _
  $region15: #{critic_forward.3} parent=0 // pred_check_branch
    %239 = sbr.rel (0) target = $region17
  $region16: #{critic_forward.3} parent=0 // pred_region
    _
  $region17: #{critic_forward.3} parent=0 // pred_fallthru
    _
  // Predicated region
  $region18: #{critic_forward.3} parent=0 // pred_check
    _
  $region19: #{critic_forward.3} parent=0 // pred_check_branch
    %241 = sbr.rel (0) target = $region21
  $region20: #{critic_forward.3} parent=0 // pred_region
    _
  $region21: #{critic_forward.3} parent=0 // pred_fallthru
    _

// kernel: critic_forward.4
$region0: #{critic_forward.4}
  #allocation0 [shape = 'u32[]', space=smem, size = 0x4, offset = 0x4, fixed_abs, tag = 'smem constant byte address 0x4 - core index']
  #allocation1 [shape = 'u32[144,128]{1,0:T(1,128)}', space=vmem, size = 0x12000, scoped, tag = 'internal scratch']
  %s0 = inlined_call_operand.vmem [shape: f32[56,72], index: 0, kind: input, shape index: {}]
  %s1 = inlined_call_operand.vmem [shape: f32[72,128], index: 1, kind: input, shape index: {}]
  %s2 = inlined_call_operand.vmem [shape: f32[1,128], index: 2, kind: input, shape index: {}]
  %s3 = inlined_call_operand.vmem [shape: f32[56,128], index: 3, kind: output, shape index: {}]
  %s4 = sld [smem:[#allocation0]]
  $region22: #{critic_forward.4} parent=0
    _
  %s6 = ssub.s32 1, %s4
  %s7 = scalar_select 0, %s6, %s4
  // Predicated region
  $region2: #{critic_forward.4} parent=0 // pred_check
    _
  $region3: #{critic_forward.4} parent=0 // pred_check_branch
    %9 = sbr.rel (0) target = $region5
  $region4: #{critic_forward.4} parent=0 // pred_region
    _
  $region5: #{critic_forward.4} parent=0 // pred_fallthru
    _
  // Predicated region
  $region6: #{critic_forward.4} parent=0 // pred_check
    _
  $region7: #{critic_forward.4} parent=0 // pred_check_branch
    %11 = sbr.rel (0) target = $region9
  $region8: #{critic_forward.4} parent=0 // pred_region
    _
  $region9: #{critic_forward.4} parent=0 // pred_fallthru
    _
  // Predicated region
  $region10: #{critic_forward.4} parent=0 // pred_check
    _
  $region11: #{critic_forward.4} parent=0 // pred_check_branch
    %13 = sbr.rel (0) target = $region13
  $region12: #{critic_forward.4} parent=0 // pred_region
    _
  $region13: #{critic_forward.4} parent=0 // pred_fallthru
    _
  %v14 = vld [vmem:[%s0] sm:$0xff]
  %v15 = vld [vmem:[%s0 + $0x8] sm:$0xff]
  %v16 = vld [vmem:[%s0 + $0x10] sm:$0xff]
  %v17 = vld [vmem:[%s0 + $0x18] sm:$0xff]
  %v18 = vld [vmem:[%s0 + $0x20] sm:$0xff]
  %v19 = vld [vmem:[%s0 + $0x28] sm:$0xff]
  %v20 = vld [vmem:[%s0 + $0x30] sm:$0xff]
  %v21 = vld [vmem:[%s1] sm:$0xff]
  %v22 = vld [vmem:[%s1 + $0x8] sm:$0xff]
  %v23 = vld [vmem:[%s1 + $0x10] sm:$0xff]
  %v24 = vld [vmem:[%s1 + $0x18] sm:$0xff]
  %v25 = vld [vmem:[%s1 + $0x20] sm:$0xff]
  %v26 = vld [vmem:[%s1 + $0x28] sm:$0xff]
  %v27 = vld [vmem:[%s1 + $0x30] sm:$0xff]
  %v28 = vld [vmem:[%s1 + $0x38] sm:$0xff]
  %v29 = vld [vmem:[%s1 + $0x40] sm:$0xff]
  %v30 = vld [vmem:[%s2] sm:$0x1]
  %v32 = vlaneseq
  %v33 = vshrl.u32 %v32, 7
  %v34 = vsub.s32 0, %v33
  %v35 = vrot.slane %v30, %v34
  %vm37 = vcmask 588800
  %v39 = vsel %vm37, %v14, 0
  %v42 = vsel %vm37, %v15, 0
  %v45 = vsel %vm37, %v16, 0
  %v48 = vsel %vm37, %v17, 0
  %v51 = vsel %vm37, %v18, 0
  %v54 = vsel %vm37, %v19, 0
  %v57 = vsel %vm37, %v20, 0
  %59 = vmatprep.subr.mxu0 0.0
  %60 = vmatpush1.msra.mxu0 0.0
  %61 = vmatprep.subr.mxu0 0.0
  %62 = vmatpush1.msra.mxu0 0.0
  %63 = vmatprep.subr.mxu0 0.0
  %64 = vmatpush1.msra.mxu0 0.0
  %65 = vmatprep.subr.mxu0 0.0
  %66 = vmatpush1.msra.mxu0 0.0
  %67 = vmatprep.subr.mxu0 0.0
  %68 = vmatpush1.msra.mxu0 0.0
  %69 = vmatprep.subr.mxu0 0.0
  %70 = vmatpush1.msra.mxu0 0.0
  %71 = vmatprep.subr.mxu0 0.0
  %72 = vmatpush1.msra.mxu0 0.0
  %73 = vmatprep.subr.mxu0 0.0
  %74 = vmatpush1.msra.mxu0 %v29
  %75 = vmatprep.subr.mxu0 0.0
  %76 = vmatpush1.msra.mxu0 %v28
  %77 = vmatprep.subr.mxu0 0.0
  %78 = vmatpush1.msra.mxu0 %v27
  %79 = vmatprep.subr.mxu0 0.0
  %80 = vmatpush1.msra.mxu0 %v26
  %81 = vmatprep.subr.mxu0 0.0
  %82 = vmatpush1.msra.mxu0 %v25
  %83 = vmatprep.subr.mxu0 0.0
  %84 = vmatpush1.msra.mxu0 %v24
  %85 = vmatprep.subr.mxu0 0.0
  %86 = vmatpush1.msra.mxu0 %v23
  %87 = vmatprep.subr.mxu0 0.0
  %88 = vmatpush1.msra.mxu0 %v22
  %89 = vmatprep.subr.mxu0 0.0
  %90 = vmatpush1.msra.mxu0 %v21
  %91 = vmatprep.subr.mxu0 0.0
  %92 = vmatpush2.msra.mxu0 0.0
  %93 = vmatprep.subr.mxu0 0.0
  %94 = vmatpush2.msra.mxu0 0.0
  %95 = vmatprep.subr.mxu0 0.0
  %96 = vmatpush2.msra.mxu0 0.0
  %97 = vmatprep.subr.mxu0 0.0
  %98 = vmatpush2.msra.mxu0 0.0
  %99 = vmatprep.subr.mxu0 0.0
  %100 = vmatpush2.msra.mxu0 0.0
  %101 = vmatprep.subr.mxu0 0.0
  %102 = vmatpush2.msra.mxu0 0.0
  %103 = vmatprep.subr.mxu0 0.0
  %104 = vmatpush2.msra.mxu0 0.0
  %105 = vmatprep.subr.mxu0 0.0
  %106 = vmatpush2.msra.mxu0 0.0
  %107 = vmatprep.subr.mxu0 0.0
  %108 = vmatpush2.msra.mxu0 0.0
  %109 = vmatprep.subr.mxu0 0.0
  %110 = vmatpush2.msra.mxu0 0.0
  %111 = vmatprep.subr.mxu0 0.0
  %112 = vmatpush2.msra.mxu0 0.0
  %113 = vmatprep.subr.mxu0 0.0
  %114 = vmatpush2.msra.mxu0 0.0
  %115 = vmatprep.subr.mxu0 0.0
  %116 = vmatpush2.msra.mxu0 0.0
  %117 = vmatprep.subr.mxu0 0.0
  %118 = vmatpush2.msra.mxu0 0.0
  %119 = vmatprep.subr.mxu0 0.0
  %120 = vmatpush2.msra.mxu0 0.0
  %121 = vmatprep.subr.mxu0 0.0
  %122 = vmatpush2.msra.mxu0 0.0
  %123 = vmatprep.mubr.f32.mxu0 0.0
  %124 = vmatmul.mubr.f32.gmra.mxu0 %v39
  %v125 = vpop.f32.mrf.mxu0
  %v126 = vadd.f32 %v35, %v125
  %v127 = vpop.f32.mrf.mxu0
  %128 = vmatprep.mubr.f32.mxu0 0.0
  %129 = vmatmul.mubr.f32.gmra.mxu0 %v42
  %v130 = vpop.f32.mrf.mxu0
  %v131 = vadd.f32 %v35, %v130
  %v132 = vpop.f32.mrf.mxu0
  %133 = vmatprep.mubr.f32.mxu0 0.0
  %134 = vmatmul.mubr.f32.gmra.mxu0 %v45
  %v135 = vpop.f32.mrf.mxu0
  %v136 = vadd.f32 %v35, %v135
  %v137 = vpop.f32.mrf.mxu0
  %138 = vmatprep.mubr.f32.mxu0 0.0
  %139 = vmatmul.mubr.f32.gmra.mxu0 %v48
  %v140 = vpop.f32.mrf.mxu0
  %v141 = vadd.f32 %v35, %v140
  %v142 = vpop.f32.mrf.mxu0
  %143 = vmatprep.mubr.f32.mxu0 0.0
  %144 = vmatmul.mubr.f32.gmra.mxu0 %v51
  %v145 = vpop.f32.mrf.mxu0
  %v146 = vadd.f32 %v35, %v145
  %v147 = vpop.f32.mrf.mxu0
  %148 = vmatprep.mubr.f32.mxu0 0.0
  %149 = vmatmul.mubr.f32.gmra.mxu0 %v54
  %v150 = vpop.f32.mrf.mxu0
  %v151 = vadd.f32 %v35, %v150
  %v152 = vpop.f32.mrf.mxu0
  %153 = vmatprep.mubr.f32.mxu0 0.0
  %154 = vmatmul.mubr.f32.gmra.mxu0 %v57
  %v155 = vpop.f32.mrf.mxu0
  %v156 = vadd.f32 %v35, %v155
  %v157 = vpop.f32.mrf.mxu0
  %158 = vdwg.mxu0
  %v159 = vmax.f32 %v126, 0.0
  %v160 = vmax.f32 %v131, 0.0
  %v161 = vmax.f32 %v136, 0.0
  %v162 = vmax.f32 %v141, 0.0
  %v163 = vmax.f32 %v146, 0.0
  %v164 = vmax.f32 %v151, 0.0
  %v165 = vmax.f32 %v156, 0.0
  %166 = vst [vmem:[%s3] sm:$0xff] %v159
  %167 = vst [vmem:[%s3 + $0x8] sm:$0xff] %v160
  %168 = vst [vmem:[%s3 + $0x10] sm:$0xff] %v161
  %169 = vst [vmem:[%s3 + $0x18] sm:$0xff] %v162
  %170 = vst [vmem:[%s3 + $0x20] sm:$0xff] %v163
  %171 = vst [vmem:[%s3 + $0x28] sm:$0xff] %v164
  %172 = vst [vmem:[%s3 + $0x30] sm:$0xff] %v165
  // Predicated region
  $region14: #{critic_forward.4} parent=0 // pred_check
    _
  $region15: #{critic_forward.4} parent=0 // pred_check_branch
    %174 = sbr.rel (0) target = $region17
  $region16: #{critic_forward.4} parent=0 // pred_region
    _
  $region17: #{critic_forward.4} parent=0 // pred_fallthru
    _
  // Predicated region
  $region18: #{critic_forward.4} parent=0 // pred_check
    _
  $region19: #{critic_forward.4} parent=0 // pred_check_branch
    %176 = sbr.rel (0) target = $region21
  $region20: #{critic_forward.4} parent=0 // pred_region
    _
  $region21: #{critic_forward.4} parent=0 // pred_fallthru
    _

// kernel: critic_forward.5
$region0: #{critic_forward.5}
  #allocation0 [shape = 'u32[]', space=smem, size = 0x4, offset = 0x4, fixed_abs, tag = 'smem constant byte address 0x4 - core index']
  #allocation1 [shape = 'u32[144,128]{1,0:T(1,128)}', space=vmem, size = 0x12000, scoped, tag = 'internal scratch']
  %s0 = inlined_call_operand.vmem [shape: f32[8,200], index: 0, kind: input, shape index: {}]
  %s1 = inlined_call_operand.vmem [shape: f32[8,4], index: 1, kind: input, shape index: {}]
  %s2 = inlined_call_operand.vmem [shape: f32[200,32], index: 2, kind: input, shape index: {}]
  %s3 = inlined_call_operand.vmem [shape: f32[1,32], index: 3, kind: input, shape index: {}]
  %s4 = inlined_call_operand.vmem [shape: f32[1,32], index: 4, kind: input, shape index: {}]
  %s5 = inlined_call_operand.vmem [shape: f32[1,32], index: 5, kind: input, shape index: {}]
  %s6 = inlined_call_operand.vmem [shape: f32[32,64], index: 6, kind: input, shape index: {}]
  %s7 = inlined_call_operand.vmem [shape: f32[4,64], index: 7, kind: input, shape index: {}]
  %s8 = inlined_call_operand.vmem [shape: f32[1,64], index: 8, kind: input, shape index: {}]
  %s9 = inlined_call_operand.vmem [shape: f32[64,64], index: 9, kind: input, shape index: {}]
  %s10 = inlined_call_operand.vmem [shape: f32[1,64], index: 10, kind: input, shape index: {}]
  %s11 = inlined_call_operand.vmem [shape: f32[64,128], index: 11, kind: input, shape index: {}]
  %s12 = inlined_call_operand.vmem [shape: f32[1,128], index: 12, kind: input, shape index: {}]
  %s13 = inlined_call_operand.vmem [shape: f32[8,128], index: 13, kind: output, shape index: {}]
  %s14 = sld [smem:[#allocation0]]
  $region62: #{critic_forward.5} parent=0
    _
  %s16 = ssub.s32 1, %s14
  %s17 = scalar_select 0, %s16, %s14
  // Predicated region
  $region2: #{critic_forward.5} parent=0 // pred_check
    _
  $region3: #{critic_forward.5} parent=0 // pred_check_branch
    %19 = sbr.rel (0) target = $region5
  $region4: #{critic_forward.5} parent=0 // pred_region
    _
  $region5: #{critic_forward.5} parent=0 // pred_fallthru
    _
  // Predicated region
  $region6: #{critic_forward.5} parent=0 // pred_check
    _
  $region7: #{critic_forward.5} parent=0 // pred_check_branch
    %21 = sbr.rel (0) target = $region9
  $region8: #{critic_forward.5} parent=0 // pred_region
    _
  $region9: #{critic_forward.5} parent=0 // pred_fallthru
    _
  // Predicated region
  $region10: #{critic_forward.5} parent=0 // pred_check
    _
  $region11: #{critic_forward.5} parent=0 // pred_check_branch
    %23 = sbr.rel (0) target = $region13
  $region12: #{critic_forward.5} parent=0 // pred_region
    _
  $region13: #{critic_forward.5} parent=0 // pred_fallthru
    _
  // Predicated region
  $region14: #{critic_forward.5} parent=0 // pred_check
    _
  $region15: #{critic_forward.5} parent=0 // pred_check_branch
    %25 = sbr.rel (0) target = $region17
  $region16: #{critic_forward.5} parent=0 // pred_region
    _
  $region17: #{critic_forward.5} parent=0 // pred_fallthru
    _
  // Predicated region
  $region18: #{critic_forward.5} parent=0 // pred_check
    _
  $region19: #{critic_forward.5} parent=0 // pred_check_branch
    %27 = sbr.rel (0) target = $region21
  $region20: #{critic_forward.5} parent=0 // pred_region
    _
  $region21: #{critic_forward.5} parent=0 // pred_fallthru
    _
  // Predicated region
  $region22: #{critic_forward.5} parent=0 // pred_check
    _
  $region23: #{critic_forward.5} parent=0 // pred_check_branch
    %29 = sbr.rel (0) target = $region25
  $region24: #{critic_forward.5} parent=0 // pred_region
    _
  $region25: #{critic_forward.5} parent=0 // pred_fallthru
    _
  // Predicated region
  $region26: #{critic_forward.5} parent=0 // pred_check
    _
  $region27: #{critic_forward.5} parent=0 // pred_check_branch
    %31 = sbr.rel (0) target = $region29
  $region28: #{critic_forward.5} parent=0 // pred_region
    _
  $region29: #{critic_forward.5} parent=0 // pred_fallthru
    _
  // Predicated region
  $region30: #{critic_forward.5} parent=0 // pred_check
    _
  $region31: #{critic_forward.5} parent=0 // pred_check_branch
    %33 = sbr.rel (0) target = $region33
  $region32: #{critic_forward.5} parent=0 // pred_region
    _
  $region33: #{critic_forward.5} parent=0 // pred_fallthru
    _
  // Predicated region
  $region34: #{critic_forward.5} parent=0 // pred_check
    _
  $region35: #{critic_forward.5} parent=0 // pred_check_branch
    %35 = sbr.rel (0) target = $region37
  $region36: #{critic_forward.5} parent=0 // pred_region
    _
  $region37: #{critic_forward.5} parent=0 // pred_fallthru
    _
  // Predicated region
  $region38: #{critic_forward.5} parent=0 // pred_check
    _
  $region39: #{critic_forward.5} parent=0 // pred_check_branch
    %37 = sbr.rel (0) target = $region41
  $region40: #{critic_forward.5} parent=0 // pred_region
    _
  $region41: #{critic_forward.5} parent=0 // pred_fallthru
    _
  // Predicated region
  $region42: #{critic_forward.5} parent=0 // pred_check
    _
  $region43: #{critic_forward.5} parent=0 // pred_check_branch
    %39 = sbr.rel (0) target = $region45
  $region44: #{critic_forward.5} parent=0 // pred_region
    _
  $region45: #{critic_forward.5} parent=0 // pred_fallthru
    _
  // Predicated region
  $region46: #{critic_forward.5} parent=0 // pred_check
    _
  $region47: #{critic_forward.5} parent=0 // pred_check_branch
    %41 = sbr.rel (0) target = $region49
  $region48: #{critic_forward.5} parent=0 // pred_region
    _
  $region49: #{critic_forward.5} parent=0 // pred_fallthru
    _
  // Predicated region
  $region50: #{critic_forward.5} parent=0 // pred_check
    _
  $region51: #{critic_forward.5} parent=0 // pred_check_branch
    %43 = sbr.rel (0) target = $region53
  $region52: #{critic_forward.5} parent=0 // pred_region
    _
  $region53: #{critic_forward.5} parent=0 // pred_fallthru
    _
  %v44 = vld [vmem:[%s0] sm:$0xff]
  %v45 = vld [vmem:[%s0 + $0x8] sm:$0xff]
  %v46 = vld [vmem:[%s2] sm:$0xff]
  %v47 = vld [vmem:[%s2 + $0x8] sm:$0xff]
  %v48 = vld [vmem:[%s2 + $0x10] sm:$0xff]
  %v49 = vld [vmem:[%s2 + $0x18] sm:$0xff]
  %v50 = vld [vmem:[%s2 + $0x20] sm:$0xff]
  %v51 = vld [vmem:[%s2 + $0x28] sm:$0xff]
  %v52 = vld [vmem:[%s2 + $0x30] sm:$0xff]
  %v53 = vld [vmem:[%s2 + $0x38] sm:$0xff]
  %v54 = vld [vmem:[%s2 + $0x40] sm:$0xff]
  %v55 = vld [vmem:[%s2 + $0x48] sm:$0xff]
  %v56 = vld [vmem:[%s2 + $0x50] sm:$0xff]
  %v57 = vld [vmem:[%s2 + $0x58] sm:$0xff]
  %v58 = vld [vmem:[%s2 + $0x60] sm:$0xff]
  %v59 = vld [vmem:[%s2 + $0x68] sm:$0xff]
  %v60 = vld [vmem:[%s2 + $0x70] sm:$0xff]
  %v61 = vld [vmem:[%s2 + $0x78] sm:$0xff]
  %v62 = vld [vmem:[%s2 + $0x80] sm:$0xff]
  %v63 = vld [vmem:[%s2 + $0x88] sm:$0xff]
  %v64 = vld [vmem:[%s2 + $0x90] sm:$0xff]
  %v65 = vld [vmem:[%s2 + $0x98] sm:$0xff]
  %v66 = vld [vmem:[%s2 + $0xa0] sm:$0xff]
  %v67 = vld [vmem:[%s2 + $0xa8] sm:$0xff]
  %v68 = vld [vmem:[%s2 + $0xb0] sm:$0xff]
  %v69 = vld [vmem:[%s2 + $0xb8] sm:$0xff]
  %v70 = vld [vmem:[%s2 + $0xc0] sm:$0xff]
  %v71 = vld [vmem:[%s3] sm:$0x1]
  %v73 = vlaneseq
  %v74 = vshrl.u32 %v73, 7
  %v75 = vsub.s32 0, %v74
  %v76 = vrot.slane %v71, %v75
  %vm78 = vcmask 588800
  %v80 = vsel %vm78, %v45, 0
  %82 = vmatprep.subr.mxu0 0.0
  %83 = vmatpush1.msra.mxu0 %v61
  %84 = vmatprep.subr.mxu0 0.0
  %85 = vmatpush1.msra.mxu0 %v60
  %86 = vmatprep.subr.mxu0 0.0
  %87 = vmatpush1.msra.mxu0 %v59
  %88 = vmatprep.subr.mxu0 0.0
  %89 = vmatpush1.msra.mxu0 %v58
  %90 = vmatprep.subr.mxu0 0.0
  %91 = vmatpush1.msra.mxu0 %v57
  %92 = vmatprep.subr.mxu0 0.0
  %93 = vmatpush1.msra.mxu0 %v56
  %94 = vmatprep.subr.mxu0 0.0
  %95 = vmatpush1.msra.mxu0 %v55
  %96 = vmatprep.subr.mxu0 0.0
  %97 = vmatpush1.msra.mxu0 %v54
  %98 = vmatprep.subr.mxu0 0.0
  %99 = vmatpush1.msra.mxu0 %v53
  %100 = vmatprep.subr.mxu0 0.0
  %101 = vmatpush1.msra.mxu0 %v52
  %102 = vmatprep.subr.mxu0 0.0
  %103 = vmatpush1.msra.mxu0 %v51
  %104 = vmatprep.subr.mxu0 0.0
  %105 = vmatpush1.msra.mxu0 %v50
  %106 = vmatprep.subr.mxu0 0.0
  %107 = vmatpush1.msra.mxu0 %v49
  %108 = vmatprep.subr.mxu0 0.0
  %109 = vmatpush1.msra.mxu0 %v48
  %110 = vmatprep.subr.mxu0 0.0
  %111 = vmatpush1.msra.mxu0 %v47
  %112 = vmatprep.subr.mxu0 0.0
  %113 = vmatpush1.msra.mxu0 %v46
  %114 = vmatprep.subr.mxu0 0.0
  %115 = vmatpush2.msra.mxu0 0.0
  %116 = vmatprep.subr.mxu0 0.0
  %117 = vmatpush2.msra.mxu0 0.0
  %118 = vmatprep.subr.mxu0 0.0
  %119 = vmatpush2.msra.mxu0 0.0
  %120 = vmatprep.subr.mxu0 0.0
  %121 = vmatpush2.msra.mxu0 0.0
  %122 = vmatprep.subr.mxu0 0.0
  %123 = vmatpush2.msra.mxu0 0.0
  %124 = vmatprep.subr.mxu0 0.0
  %125 = vmatpush2.msra.mxu0 0.0
  %126 = vmatprep.subr.mxu0 0.0
  %127 = vmatpush2.msra.mxu0 0.0
  %128 = vmatprep.subr.mxu0 0.0
  %129 = vmatpush2.msra.mxu0 %v70
  %130 = vmatprep.subr.mxu0 0.0
  %131 = vmatpush2.msra.mxu0 %v69
  %132 = vmatprep.subr.mxu0 0.0
  %133 = vmatpush2.msra.mxu0 %v68
  %134 = vmatprep.subr.mxu0 0.0
  %135 = vmatpush2.msra.mxu0 %v67
  %136 = vmatprep.subr.mxu0 0.0
  %137 = vmatpush2.msra.mxu0 %v66
  %138 = vmatprep.subr.mxu0 0.0
  %139 = vmatpush2.msra.mxu0 %v65
  %140 = vmatprep.subr.mxu0 0.0
  %141 = vmatpush2.msra.mxu0 %v64
  %142 = vmatprep.subr.mxu0 0.0
  %143 = vmatpush2.msra.mxu0 %v63
  %144 = vmatprep.subr.mxu0 0.0
  %145 = vmatpush2.msra.mxu0 %v62
  %146 = vmatprep.mubr.f32.mxu0 %v80
  %147 = vmatmul.mubr.f32.gmra.mxu0 %v44
  %v148 = vpop.f32.mrf.mxu0
  %v149 = vadd.f32 %v76, %v148
  %v150 = vpop.f32.mrf.mxu0
  %151 = vdwg.mxu0
  %vm152 = vcmask 261120
  %v153 = vsel %vm152, %v149, 0.0
  %154 = vadd.xlane.f32.xlu0 %v153
  %v155 = vpop.xlane.xlu0 %154
  %v156 = vrcp.pop 32.0
  %v157 = vmul.f32 %v155, %v156
  %v158 = vsub.f32 %v149, %v157
  %v159 = vmul.f32 %v158, %v158
  %v160 = vsel %vm152, %v159, 0.0
  %161 = vadd.xlane.f32.xlu0 %v160
  %v162 = vpop.xlane.xlu0 %161
  %v163 = vmul.f32 %v162, %v156
  %v164 = vadd.f32 %v163, 1e-05
  %v165 = vrsqrt.pop %v164
  %v166 = vmul.f32 %v158, %v165
  %v167 = vld [vmem:[%s4] sm:$0x1]
  %v169 = vlaneseq
  %v170 = vshrl.u32 %v169, 7
  %v171 = vsub.s32 0, %v170
  %v172 = vrot.slane %v167, %v171
  %v174 = vmul.f32 %v166, %v172
  %v175 = vld [vmem:[%s5] sm:$0x1]
  %v177 = vlaneseq
  %v178 = vshrl.u32 %v177, 7
  %v179 = vsub.s32 0, %v178
  %v180 = vrot.slane %v175, %v179
  %v182 = vadd.f32 %v174, %v180
  %v183 = vld [vmem:[%s6] sm:$0xff]
  %v184 = vld [vmem:[%s6 + $0x8] sm:$0xff]
  %v185 = vld [vmem:[%s6 + $0x10] sm:$0xff]
  %v186 = vld [vmem:[%s6 + $0x18] sm:$0xff]
  %v187 = vld [vmem:[%s1] sm:$0xff]
  %v188 = vld [vmem:[%s7] sm:$0xf]
  %vm189 = vcmask 31744
  %v191 = vsel %vm189, %v187, 0
  %vm193 = vcmask 1043456
  %v195 = vsel %vm193, %v188, 0
  %197 = vmatprep.subr.mxu0 0.0
  %198 = vmatpush1.msra.mxu0 0.0
  %199 = vmatprep.subr.mxu0 0.0
  %200 = vmatpush1.msra.mxu0 0.0
  %201 = vmatprep.subr.mxu0 0.0
  %202 = vmatpush1.msra.mxu0 0.0
  %203 = vmatprep.subr.mxu0 0.0
  %204 = vmatpush1.msra.mxu0 0.0
  %205 = vmatprep.subr.mxu0 0.0
  %206 = vmatpush1.msra.mxu0 0.0
  %207 = vmatprep.subr.mxu0 0.0
  %208 = vmatpush1.msra.mxu0 0.0
  %209 = vmatprep.subr.mxu0 0.0
  %210 = vmatpush1.msra.mxu0 0.0
  %211 = vmatprep.subr.mxu0 0.0
  %212 = vmatpush1.msra.mxu0 0.0
  %213 = vmatprep.subr.mxu0 0.0
  %214 = vmatpush1.msra.mxu0 0.0
  %215 = vmatprep.subr.mxu0 0.0
  %216 = vmatpush1.msra.mxu0 0.0
  %217 = vmatprep.subr.mxu0 0.0
  %218 = vmatpush1.msra.mxu0 0.0
  %219 = vmatprep.subr.mxu0 0.0
  %220 = vmatpush1.msra.mxu0 0.0
  %221 = vmatprep.subr.mxu0 0.0
  %222 = vmatpush1.msra.mxu0 0.0
  %223 = vmatprep.subr.mxu0 0.0
  %224 = vmatpush1.msra.mxu0 0.0
  %225 = vmatprep.subr.mxu0 0.0
  %226 = vmatpush1.msra.mxu0 0.0
  %227 = vmatprep.subr.mxu0 0.0
  %228 = vmatpush1.msra.mxu0 %v195
  %229 = vmatprep.subr.mxu0 0.0
  %230 = vmatpush2.msra.mxu0 0.0
  %231 = vmatprep.subr.mxu0 0.0
  %232 = vmatpush2.msra.mxu0 0.0
  %233 = vmatprep.subr.mxu0 0.0
  %234 = vmatpush2.msra.mxu0 0.0
  %235 = vmatprep.subr.mxu0 0.0
  %236 = vmatpush2.msra.mxu0 0.0
  %237 = vmatprep.subr.mxu0 0.0
  %238 = vmatpush2.msra.mxu0 0.0
  %239 = vmatprep.subr.mxu0 0.0
  %240 = vmatpush2.msra.mxu0 0.0
  %241 = vmatprep.subr.mxu0 0.0
  %242 = vmatpush2.msra.mxu0 0.0
  %243 = vmatprep.subr.mxu0 0.0
  %244 = vmatpush2.msra.mxu0 0.0
  %245 = vmatprep.subr.mxu0 0.0
  %246 = vmatpush2.msra.mxu0 0.0
  %247 = vmatprep.subr.mxu0 0.0
  %248 = vmatpush2.msra.mxu0 0.0
  %249 = vmatprep.subr.mxu0 0.0
  %250 = vmatpush2.msra.mxu0 0.0
  %251 = vmatprep.subr.mxu0 0.0
  %252 = vmatpush2.msra.mxu0 0.0
  %253 = vmatprep.subr.mxu0 0.0
  %254 = vmatpush2.msra.mxu0 0.0
  %255 = vmatprep.subr.mxu0 0.0
  %256 = vmatpush2.msra.mxu0 0.0
  %257 = vmatprep.subr.mxu0 0.0
  %258 = vmatpush2.msra.mxu0 0.0
  %259 = vmatprep.subr.mxu0 0.0
  %260 = vmatpush2.msra.mxu0 0.0
  %261 = vmatprep.mubr.f32.mxu0 0.0
  %262 = vmatmul.mubr.f32.gmra.mxu0 %v191
  %v263 = vpop.f32.mrf.mxu0
  %v264 = vadd.f32 0.0, %v263
  %v265 = vpop.f32.mrf.mxu0
  %266 = vdwg.mxu0
  %v268 = vsel %vm152, %v182, 0
  %270 = vmatprep.subr.mxu0 0.0
  %271 = vmatpush1.msra.mxu0 0.0
  %272 = vmatprep.subr.mxu0 0.0
  %273 = vmatpush1.msra.mxu0 0.0
  %274 = vmatprep.subr.mxu0 0.0
  %275 = vmatpush1.msra.mxu0 0.0
  %276 = vmatprep.subr.mxu0 0.0
  %277 = vmatpush1.msra.mxu0 0.0
  %278 = vmatprep.subr.mxu0 0.0
  %279 = vmatpush1.msra.mxu0 0.0
  %280 = vmatprep.subr.mxu0 0.0
  %281 = vmatpush1.msra.mxu0 0.0
  %282 = vmatprep.subr.mxu0 0.0
  %283 = vmatpush1.msra.mxu0 0.0
  %284 = vmatprep.subr.mxu0 0.0
  %285 = vmatpush1.msra.mxu0 0.0
  %286 = vmatprep.subr.mxu0 0.0
  %287 = vmatpush1.msra.mxu0 0.0
  %288 = vmatprep.subr.mxu0 0.0
  %289 = vmatpush1.msra.mxu0 0.0
  %290 = vmatprep.subr.mxu0 0.0
  %291 = vmatpush1.msra.mxu0 0.0
  %292 = vmatprep.subr.mxu0 0.0
  %293 = vmatpush1.msra.mxu0 0.0
  %294 = vmatprep.subr.mxu0 0.0
  %295 = vmatpush1.msra.mxu0 %v186
  %296 = vmatprep.subr.mxu0 0.0
  %297 = vmatpush1.msra.mxu0 %v185
  %298 = vmatprep.subr.mxu0 0.0
  %299 = vmatpush1.msra.mxu0 %v184
  %300 = vmatprep.subr.mxu0 0.0
  %301 = vmatpush1.msra.mxu0 %v183
  %302 = vmatprep.subr.mxu0 0.0
  %303 = vmatpush2.msra.mxu0 0.0
  %304 = vmatprep.subr.mxu0 0.0
  %305 = vmatpush2.msra.mxu0 0.0
  %306 = vmatprep.subr.mxu0 0.0
  %307 = vmatpush2.msra.mxu0 0.0
  %308 = vmatprep.subr.mxu0 0.0
  %309 = vmatpush2.msra.mxu0 0.0
  %310 = vmatprep.subr.mxu0 0.0
  %311 = vmatpush2.msra.mxu0 0.0
  %312 = vmatprep.subr.mxu0 0.0
  %313 = vmatpush2.msra.mxu0 0.0
  %314 = vmatprep.subr.mxu0 0.0
  %315 = vmatpush2.msra.mxu0 0.0
  %316 = vmatprep.subr.mxu0 0.0
  %317 = vmatpush2.msra.mxu0 0.0
  %318 = vmatprep.subr.mxu0 0.0
  %319 = vmatpush2.msra.mxu0 0.0
  %320 = vmatprep.subr.mxu0 0.0
  %321 = vmatpush2.msra.mxu0 0.0
  %322 = vmatprep.subr.mxu0 0.0
  %323 = vmatpush2.msra.mxu0 0.0
  %324 = vmatprep.subr.mxu0 0.0
  %325 = vmatpush2.msra.mxu0 0.0
  %326 = vmatprep.subr.mxu0 0.0
  %327 = vmatpush2.msra.mxu0 0.0
  %328 = vmatprep.subr.mxu0 0.0
  %329 = vmatpush2.msra.mxu0 0.0
  %330 = vmatprep.subr.mxu0 0.0
  %331 = vmatpush2.msra.mxu0 0.0
  %332 = vmatprep.subr.mxu0 0.0
  %333 = vmatpush2.msra.mxu0 0.0
  %334 = vmatprep.mubr.f32.mxu0 0.0
  %335 = vmatmul.mubr.f32.gmra.mxu0 %v268
  %v336 = vpop.f32.mrf.mxu0
  %v337 = vadd.f32 %v264, %v336
  %v338 = vpop.f32.mrf.mxu0
  %339 = vdwg.mxu0
  %v340 = vld [vmem:[%s8] sm:$0x1]
  %v342 = vlaneseq
  %v343 = vshrl.u32 %v342, 7
  %v344 = vsub.s32 0, %v343
  %v345 = vrot.slane %v340, %v344
  %v347 = vadd.f32 %v337, %v345
  %v348 = vmax.f32 %v347, 0.0
  %v349 = vld [vmem:[%s9] sm:$0xff]
  %v350 = vld [vmem:[%s9 + $0x8] sm:$0xff]
  %v351 = vld [vmem:[%s9 + $0x10] sm:$0xff]
  %v352 = vld [vmem:[%s9 + $0x18] sm:$0xff]
  %v353 = vld [vmem:[%s9 + $0x20] sm:$0xff]
  %v354 = vld [vmem:[%s9 + $0x28] sm:$0xff]
  %v355 = vld [vmem:[%s9 + $0x30] sm:$0xff]
  %v356 = vld [vmem:[%s9 + $0x38] sm:$0xff]
  %v357 = vld [vmem:[%s10] sm:$0x1]
  %v359 = vlaneseq
  %v360 = vshrl.u32 %v359, 7
  %v361 = vsub.s32 0, %v360
  %v362 = vrot.slane %v357, %v361
  %vm364 = vcmask 523264
  %v366 = vsel %vm364, %v348, 0
  %368 = vmatprep.subr.mxu0 0.0
  %369 = vmatpush1.msra.mxu0 0.0
  %370 = vmatprep.subr.mxu0 0.0
  %371 = vmatpush1.msra.mxu0 0.0
  %372 = vmatprep.subr.mxu0 0.0
  %373 = vmatpush1.msra.mxu0 0.0
  %374 = vmatprep.subr.mxu0 0.0
  %375 = vmatpush1.msra.mxu0 0.0
  %376 = vmatprep.subr.mxu0 0.0
  %377 = vmatpush1.msra.mxu0 0.0
  %378 = vmatprep.subr.mxu0 0.0
  %379 = vmatpush1.msra.mxu0 0.0
  %380 = vmatprep.subr.mxu0 0.0
  %381 = vmatpush1.msra.mxu0 0.0
  %382 = vmatprep.subr.mxu0 0.0
  %383 = vmatpush1.msra.mxu0 0.0
  %384 = vmatprep.subr.mxu0 0.0
  %385 = vmatpush1.msra.mxu0 %v356
  %386 = vmatprep.subr.mxu0 0.0
  %387 = vmatpush1.msra.mxu0 %v355
  %388 = vmatprep.subr.mxu0 0.0
  %389 = vmatpush1.msra.mxu0 %v354
  %390 = vmatprep.subr.mxu0 0.0
  %391 = vmatpush1.msra.mxu0 %v353
  %392 = vmatprep.subr.mxu0 0.0
  %393 = vmatpush1.msra.mxu0 %v352
  %394 = vmatprep.subr.mxu0 0.0
  %395 = vmatpush1.msra.mxu0 %v351
  %396 = vmatprep.subr.mxu0 0.0
  %397 = vmatpush1.msra.mxu0 %v350
  %398 = vmatprep.subr.mxu0 0.0
  %399 = vmatpush1.msra.mxu0 %v349
  %400 = vmatprep.subr.mxu0 0.0
  %401 = vmatpush2.msra.mxu0 0.0
  %402 = vmatprep.subr.mxu0 0.0
  %403 = vmatpush2.msra.mxu0 0.0
  %404 = vmatprep.subr.mxu0 0.0
  %405 = vmatpush2.msra.mxu0 0.0
  %406 = vmatprep.subr.mxu0 0.0
  %407 = vmatpush2.msra.mxu0 0.0
  %408 = vmatprep.subr.mxu0 0.0
  %409 = vmatpush2.msra.mxu0 0.0
  %410 = vmatprep.subr.mxu0 0.0
  %411 = vmatpush2.msra.mxu0 0.0
  %412 = vmatprep.subr.mxu0 0.0
  %413 = vmatpush2.msra.mxu0 0.0
  %414 = vmatprep.subr.mxu0 0.0
  %415 = vmatpush2.msra.mxu0 0.0
  %416 = vmatprep.subr.mxu0 0.0
  %417 = vmatpush2.msra.mxu0 0.0
  %418 = vmatprep.subr.mxu0 0.0
  %419 = vmatpush2.msra.mxu0 0.0
  %420 = vmatprep.subr.mxu0 0.0
  %421 = vmatpush2.msra.mxu0 0.0
  %422 = vmatprep.subr.mxu0 0.0
  %423 = vmatpush2.msra.mxu0 0.0
  %424 = vmatprep.subr.mxu0 0.0
  %425 = vmatpush2.msra.mxu0 0.0
  %426 = vmatprep.subr.mxu0 0.0
  %427 = vmatpush2.msra.mxu0 0.0
  %428 = vmatprep.subr.mxu0 0.0
  %429 = vmatpush2.msra.mxu0 0.0
  %430 = vmatprep.subr.mxu0 0.0
  %431 = vmatpush2.msra.mxu0 0.0
  %432 = vmatprep.mubr.f32.mxu0 0.0
  %433 = vmatmul.mubr.f32.gmra.mxu0 %v366
  %v434 = vpop.f32.mrf.mxu0
  %v435 = vadd.f32 %v362, %v434
  %v436 = vpop.f32.mrf.mxu0
  %437 = vdwg.mxu0
  %v438 = vmax.f32 %v435, 0.0
  %v439 = vld [vmem:[%s11] sm:$0xff]
  %v440 = vld [vmem:[%s11 + $0x8] sm:$0xff]
  %v441 = vld [vmem:[%s11 + $0x10] sm:$0xff]
  %v442 = vld [vmem:[%s11 + $0x18] sm:$0xff]
  %v443 = vld [vmem:[%s11 + $0x20] sm:$0xff]
  %v444 = vld [vmem:[%s11 + $0x28] sm:$0xff]
  %v445 = vld [vmem:[%s11 + $0x30] sm:$0xff]
  %v446 = vld [vmem:[%s11 + $0x38] sm:$0xff]
  %v447 = vld [vmem:[%s12] sm:$0x1]
  %v449 = vlaneseq
  %v450 = vshrl.u32 %v449, 7
  %v451 = vsub.s32 0, %v450
  %v452 = vrot.slane %v447, %v451
  %v455 = vsel %vm364, %v438, 0
  %457 = vmatprep.subr.mxu0 0.0
  %458 = vmatpush1.msra.mxu0 0.0
  %459 = vmatprep.subr.mxu0 0.0
  %460 = vmatpush1.msra.mxu0 0.0
  %461 = vmatprep.subr.mxu0 0.0
  %462 = vmatpush1.msra.mxu0 0.0
  %463 = vmatprep.subr.mxu0 0.0
  %464 = vmatpush1.msra.mxu0 0.0
  %465 = vmatprep.subr.mxu0 0.0
  %466 = vmatpush1.msra.mxu0 0.0
  %467 = vmatprep.subr.mxu0 0.0
  %468 = vmatpush1.msra.mxu0 0.0
  %469 = vmatprep.subr.mxu0 0.0
  %470 = vmatpush1.msra.mxu0 0.0
  %471 = vmatprep.subr.mxu0 0.0
  %472 = vmatpush1.msra.mxu0 0.0
  %473 = vmatprep.subr.mxu0 0.0
  %474 = vmatpush1.msra.mxu0 %v446
  %475 = vmatprep.subr.mxu0 0.0
  %476 = vmatpush1.msra.mxu0 %v445
  %477 = vmatprep.subr.mxu0 0.0
  %478 = vmatpush1.msra.mxu0 %v444
  %479 = vmatprep.subr.mxu0 0.0
  %480 = vmatpush1.msra.mxu0 %v443
  %481 = vmatprep.subr.mxu0 0.0
  %482 = vmatpush1.msra.mxu0 %v442
  %483 = vmatprep.subr.mxu0 0.0
  %484 = vmatpush1.msra.mxu0 %v441
  %485 = vmatprep.subr.mxu0 0.0
  %486 = vmatpush1.msra.mxu0 %v440
  %487 = vmatprep.subr.mxu0 0.0
  %488 = vmatpush1.msra.mxu0 %v439
  %489 = vmatprep.subr.mxu0 0.0
  %490 = vmatpush2.msra.mxu0 0.0
  %491 = vmatprep.subr.mxu0 0.0
  %492 = vmatpush2.msra.mxu0 0.0
  %493 = vmatprep.subr.mxu0 0.0
  %494 = vmatpush2.msra.mxu0 0.0
  %495 = vmatprep.subr.mxu0 0.0
  %496 = vmatpush2.msra.mxu0 0.0
  %497 = vmatprep.subr.mxu0 0.0
  %498 = vmatpush2.msra.mxu0 0.0
  %499 = vmatprep.subr.mxu0 0.0
  %500 = vmatpush2.msra.mxu0 0.0
  %501 = vmatprep.subr.mxu0 0.0
  %502 = vmatpush2.msra.mxu0 0.0
  %503 = vmatprep.subr.mxu0 0.0
  %504 = vmatpush2.msra.mxu0 0.0
  %505 = vmatprep.subr.mxu0 0.0
  %506 = vmatpush2.msra.mxu0 0.0
  %507 = vmatprep.subr.mxu0 0.0
  %508 = vmatpush2.msra.mxu0 0.0
  %509 = vmatprep.subr.mxu0 0.0
  %510 = vmatpush2.msra.mxu0 0.0
  %511 = vmatprep.subr.mxu0 0.0
  %512 = vmatpush2.msra.mxu0 0.0
  %513 = vmatprep.subr.mxu0 0.0
  %514 = vmatpush2.msra.mxu0 0.0
  %515 = vmatprep.subr.mxu0 0.0
  %516 = vmatpush2.msra.mxu0 0.0
  %517 = vmatprep.subr.mxu0 0.0
  %518 = vmatpush2.msra.mxu0 0.0
  %519 = vmatprep.subr.mxu0 0.0
  %520 = vmatpush2.msra.mxu0 0.0
  %521 = vmatprep.mubr.f32.mxu0 0.0
  %522 = vmatmul.mubr.f32.gmra.mxu0 %v455
  %v523 = vpop.f32.mrf.mxu0
  %v524 = vadd.f32 %v452, %v523
  %v525 = vpop.f32.mrf.mxu0
  %526 = vdwg.mxu0
  %527 = vst [vmem:[%s13] sm:$0xff] %v524
  // Predicated region
  $region54: #{critic_forward.5} parent=0 // pred_check
    _
  $region55: #{critic_forward.5} parent=0 // pred_check_branch
    %529 = sbr.rel (0) target = $region57
  $region56: #{critic_forward.5} parent=0 // pred_region
    _
  $region57: #{critic_forward.5} parent=0 // pred_fallthru
    _
  // Predicated region
  $region58: #{critic_forward.5} parent=0 // pred_check
    _
  $region59: #{critic_forward.5} parent=0 // pred_check_branch
    %531 = sbr.rel (0) target = $region61
  $region60: #{critic_forward.5} parent=0 // pred_region
    _
  $region61: #{critic_forward.5} parent=0 // pred_fallthru
    _

</llo_original>
